<compile_context>
chip_gen: v5e
topology: v5e:2x2
jax: 0.10.0
libtpu: 0.0.40
codegen_flags: <defaults>
</compile_context>

<pallas_src>
import jax
import jax.numpy as jnp
from jax.experimental import pallas as pl
from jax.experimental.pallas import tpu as pltpu


def _round_up(x, m):
    return ((x + m - 1) // m) * m


def _largest_divisor_le(n, cap):
    for d in range(min(n, cap), 0, -1):
        if n % d == 0:
            return d
    return 1


# ---------------------------------------------------------------------------
# Tiled GEMM + bias, full-K block (no reduction grid axis), N axis outermost
# so the weight matrix streams from HBM exactly once.
# ---------------------------------------------------------------------------
def matmul_bias_kernel(x_ref, w_ref, b_ref, o_ref):
    o_ref[...] = (
        jnp.dot(x_ref[...], w_ref[...], preferred_element_type=jnp.float32)
        + b_ref[...]
    ).astype(o_ref.dtype)


def matmul_bias(x, w, b, *, out_dtype=jnp.float32, tm_pref=256, tn_pref=512):
    """out = x @ w + b.  x:(M,K) bf16, w:(K,N) bf16, b:(1,N) f32.

    Full K per block (valid for K = hidden/x_dim <= ~1024); M/N padded to
    sublane/lane-dense tiles and sliced back.  Grid is (N_blocks, M_blocks):
    the weight block index only changes on the slow axis, so W is read once.
    """
    M, K = x.shape
    _, N = w.shape
    tm = min(_round_up(M, 8), tm_pref)
    tn = min(_round_up(N, 128), tn_pref)
    Mp, Np = _round_up(M, tm), _round_up(N, tn)
    xp = x if Mp == M else jnp.pad(x, ((0, Mp - M), (0, 0)))
    wp = w if Np == N else jnp.pad(w, ((0, 0), (0, Np - N)))
    bp = b if Np == N else jnp.pad(b, ((0, 0), (0, Np - N)))

    out = pl.pallas_call(
        matmul_bias_kernel,
        out_shape=jax.ShapeDtypeStruct((Mp, Np), out_dtype),
        grid_spec=pltpu.PrefetchScalarGridSpec(
            num_scalar_prefetch=0,
            grid=(Np // tn, Mp // tm),            # N outermost -> W streamed once
            in_specs=[
                pl.BlockSpec((tm, K), lambda j, i: (i, 0)),   # activations (small)
                pl.BlockSpec((K, tn), lambda j, i: (0, j)),   # weights (dominant)
                pl.BlockSpec((1, tn), lambda j, i: (0, j)),   # bias
            ],
            out_specs=pl.BlockSpec((tm, tn), lambda j, i: (i, j)),
        ),
        compiler_params=pltpu.CompilerParams(
            dimension_semantics=("parallel", "parallel"),
            vmem_limit_bytes=64 * 1024 * 1024,
        ),
    )(xp, wp, bp)
    return out if (Mp == M and Np == N) else out[:M, :N]


# ---------------------------------------------------------------------------
# Recurrent LSTM kernel: one grid step == T_CHUNK time steps for one batch block.
#   gates_x[t] = x_t @ W_ih + (b_ih + b_hh)   precomputed, bf16, (T_CHUNK, tb, 4H)
#   h0 (bsz, H) f32  and fused W_hh (H, 4H) bf16 are whole-array VMEM residents.
#   Output: hidden-state sequence hs (seq, bsz, H) in bf16; h/c state kept f32.
# ---------------------------------------------------------------------------
def lstm_chunk_kernel(gx_ref, h0_ref, whh_ref, h_out_ref, h_ref, c_ref):
    b = pl.program_id(0)           # batch block (parallel)
    t_chunk = pl.program_id(1)     # time chunk (arbitrary / sequential)
    tb, H = h_ref.shape
    T = gx_ref.shape[0]

    @pl.when(t_chunk == 0)
    def _():
        start = pl.multiple_of(b * tb, tb)
        h_ref[...] = h0_ref[pl.ds(start, tb), :]
        c_ref[...] = jnp.zeros_like(c_ref)

    w_hh = whh_ref[...]            # (H, 4H) bf16 — single resident VMEM copy

    def step(t, carry):
        h_prev, c_prev = carry     # f32 state
        # Single fused bf16 MXU dot per step; bias already folded into gates_x.
        gates = gx_ref[t].astype(jnp.float32) + jnp.dot(
            h_prev.astype(jnp.bfloat16), w_hh,
            preferred_element_type=jnp.float32)
        # PyTorch LSTM gate order: i, f, g, o — slices at 128-aligned offsets.
        i_g = jax.nn.sigmoid(gates[:, 0 * H:1 * H])
        f_g = jax.nn.sigmoid(gates[:, 1 * H:2 * H])
        g_g = jnp.tanh(gates[:, 2 * H:3 * H])
        o_g = jax.nn.sigmoid(gates[:, 3 * H:4 * H])
        c_new = f_g * c_prev + i_g * g_g
        h_new = o_g * jnp.tanh(c_new)
        h_out_ref[t] = h_new.astype(h_out_ref.dtype)
        return h_new, c_new

    h_fin, c_fin = jax.lax.fori_loop(
        0, T, step, (h_ref[...], c_ref[...]), unroll=True)
    h_ref[...] = h_fin
    c_ref[...] = c_fin


def lstm_scan(gates_x, h0, w_hh):
    seq, bsz, four_h = gates_x.shape
    hidden = four_h // 4
    t_chunk = _largest_divisor_le(seq, 16)
    # Batch split across the two v7x TensorCores when it stays sublane-dense.
    tb = bsz // 2 if (bsz >= 16 and (bsz // 2) % 8 == 0) else bsz

    return pl.pallas_call(
        lstm_chunk_kernel,
        out_shape=jax.ShapeDtypeStruct((seq, bsz, hidden), jnp.bfloat16),
        grid_spec=pltpu.PrefetchScalarGridSpec(
            num_scalar_prefetch=0,
            grid=(bsz // tb, seq // t_chunk),
            in_specs=[
                pl.BlockSpec((t_chunk, tb, four_h), lambda b, t: (t, b, 0)),
                # Constant operands: whole-array VMEM residents (single copy,
                # no wasted second pipeline buffer).
                pl.BlockSpec(memory_space=pltpu.MemorySpace.VMEM),   # h0
                pl.BlockSpec(memory_space=pltpu.MemorySpace.VMEM),   # fused W_hh
            ],
            out_specs=pl.BlockSpec((t_chunk, tb, hidden), lambda b, t: (t, b, 0)),
            scratch_shapes=[
                pltpu.VMEM((tb, hidden), jnp.float32),   # h state (f32)
                pltpu.VMEM((tb, hidden), jnp.float32),   # c state (f32)
            ],
        ),
        compiler_params=pltpu.CompilerParams(
            dimension_semantics=("parallel", "arbitrary"),
        ),
    )(gates_x, h0, w_hh)


# ---------------------------------------------------------------------------
# Full Decode forward pass.
# ---------------------------------------------------------------------------
def decode_forward(x_emb, z, y, params):
    seq, bsz, x_dim = x_emb.shape
    hidden = params["w_hh"].shape[0]
    vocab = params["w4"].shape[1]

    # bf16 weights/activations; f32 accumulation and f32 LSTM state.
    w_ih = params["w_ih"].astype(jnp.bfloat16)
    w_hh = params["w_hh"].astype(jnp.bfloat16)
    w4 = params["w4"].astype(jnp.bfloat16)
    x_bf = x_emb.astype(jnp.bfloat16)

    # fc5: tiny (bsz, z_dim+2) x (z_dim+2, hidden) — plain XLA, f32.
    z_y = jnp.concatenate([z, y], axis=1)
    h0 = z_y @ params["w5"] + params["b5"][0]                        # (bsz, hidden)

    # Hoisted LSTM input projection: ONE bf16 GEMM over (seq*bsz, x_dim) with
    # the LSTM bias (b_ih + b_hh) folded in.  Emitted bf16 (halves HBM traffic).
    gates_x = matmul_bias(x_bf.reshape(seq * bsz, x_dim), w_ih,
                          params["b_lstm"], out_dtype=jnp.bfloat16)
    gates_x = gates_x.reshape(seq, bsz, 4 * hidden)

    # Sequential LSTM recurrence (only h @ W_hh per step), time-chunked.
    hs = lstm_scan(gates_x, h0, w_hh)                                # (seq, bsz, H) bf16

    # fc4 vocab projection (dropout == identity for eval forward): bf16 GEMM with
    # the vocab axis outermost so W4 streams from HBM exactly once.
    # Tiles sized for v5e/v6e's 128 MiB VMEM; on v7x (64 MiB) use tm/tn = 256/512.
    recon = matmul_bias(hs.reshape(seq * bsz, hidden), w4, params["b4"],
                        out_dtype=jnp.float32, tm_pref=512, tn_pref=1024)
    return recon.reshape(seq, bsz, vocab)


def decode_forward_ref(x_emb, z, y, params):
    """Pure-JAX f32 reference (matches PyTorch semantics) for validation."""
    z_y = jnp.concatenate([z, y], axis=1)
    h0 = z_y @ params["w5"] + params["b5"][0]
    c0 = jnp.zeros_like(h0)
    H = h0.shape[1]

    def step(carry, x_t):
        h, c = carry
        gates = x_t @ params["w_ih"] + h @ params["w_hh"] + params["b_lstm"][0]
        i_g = jax.nn.sigmoid(gates[:, 0 * H:1 * H])
        f_g = jax.nn.sigmoid(gates[:, 1 * H:2 * H])
        g_g = jnp.tanh(gates[:, 2 * H:3 * H])
        o_g = jax.nn.sigmoid(gates[:, 3 * H:4 * H])
        c_new = f_g * c + i_g * g_g
        h_new = o_g * jnp.tanh(c_new)
        return (h_new, c_new), h_new

    _, hs = jax.lax.scan(step, (h0, c0), x_emb)
    return hs @ params["w4"] + params["b4"][0]


def init_params(key, x_dim, z_dim, hidden_dim, vocab_size):
    """Deterministic parameter init mirroring Decode.__init__ / init_weights."""
    k = jax.random.split(key, 6)
    initrange = 0.1
    stdv = 1.0 / jnp.sqrt(jnp.float32(hidden_dim))
    return {
        # fc5: Linear(z_dim + 2, hidden) — stored as (in, out)
        "w5": jax.random.uniform(k[0], (z_dim + 2, hidden_dim), jnp.float32,
                                 -initrange, initrange),
        "b5": jnp.zeros((1, hidden_dim), jnp.float32),
        # LSTM(x_dim, hidden): fused weights, gate order (i, f, g, o), stored (in, 4*out)
        "w_ih": jax.random.uniform(k[1], (x_dim, 4 * hidden_dim), jnp.float32,
                                   -stdv, stdv),
        "w_hh": jax.random.uniform(k[2], (hidden_dim, 4 * hidden_dim), jnp.float32,
                                   -stdv, stdv),
        # b_ih + b_hh combined (they always appear summed)
        "b_lstm": (jax.random.uniform(k[3], (1, 4 * hidden_dim), jnp.float32, -stdv, stdv)
                   + jax.random.uniform(k[4], (1, 4 * hidden_dim), jnp.float32, -stdv, stdv)),
        # fc4: Linear(hidden, vocab) — stored as (in, out)
        "w4": jax.random.uniform(k[5], (hidden_dim, vocab_size), jnp.float32,
                                 -initrange, initrange),
        "b4": jnp.zeros((1, vocab_size), jnp.float32),
    }


if __name__ == "__main__":
    # Small shapes: seq=32 exercises multiple time chunks; vocab=300 exercises the
    # pad-to-lane-dense path of the GEMM (sliced back to 300).
    seq, bsz = 32, 8
    x_dim, z_dim, hidden_dim, vocab_size = 128, 8, 128, 300

    key = jax.random.PRNGKey(0)
    kx, kz, ky, kp = jax.random.split(key, 4)
    x_emb = jax.random.normal(kx, (seq, bsz, x_dim), jnp.float32)
    z = jax.random.normal(kz, (bsz, z_dim), jnp.float32)
    y = jax.random.normal(ky, (bsz, 2), jnp.float32)
    params = init_params(kp, x_dim, z_dim, hidden_dim, vocab_size)

    out = jax.block_until_ready(decode_forward(x_emb, z, y, params))
    ref = decode_forward_ref(x_emb, z, y, params)

    assert out.shape == (seq, bsz, vocab_size)
    err = float(jnp.max(jnp.abs(out - ref)))
    # bf16 weights/activations vs f32 reference -> bf16-aware tolerance.
    assert err < 3e-2, f"mismatch vs reference: max abs err {err}"

    # TODO(synk): training-mode dropout before fc4 would need a pltpu.prng_seed /
    # prng_random_bits mask; this forward matches the eval-mode (identity) path.
    print("KERNEL_OK")
</pallas_src>

<mosaic_0001>
module attributes {stable_mosaic.version = 11 : i64} {
  func.func @matmul_bias_kernel(%arg0: i32, %arg1: i32, %arg2: memref<256x128xbf16, #tpu.memory_space<vmem>>, %arg3: memref<128x512xbf16, #tpu.memory_space<vmem>>, %arg4: memref<1x512xf32, #tpu.memory_space<vmem>>, %arg5: memref<256x512xbf16, #tpu.memory_space<vmem>>) attributes {dimension_semantics = [#tpu.dimension_semantics<parallel>, #tpu.dimension_semantics<parallel>], iteration_bounds = array<i64: 1, 1>, scalar_prefetch = 0 : i64, scratch_operands = 0 : i64, tpu.core_type = #tpu.core_type<tc>, window_params = [{transform_indices = @transform_0, window_bounds = array<i64: 256, 128>}, {transform_indices = @transform_1, window_bounds = array<i64: 128, 512>}, {transform_indices = @transform_2, window_bounds = array<i64: 1, 512>}, {transform_indices = @transform_3, window_bounds = array<i64: 256, 512>}]} {
    %c0 = arith.constant 0 : index
    %c0_0 = arith.constant 0 : index
    %0 = vector.load %arg2[%c0, %c0_0] : memref<256x128xbf16, #tpu.memory_space<vmem>>, vector<256x128xbf16>
    %c0_1 = arith.constant 0 : index
    %c0_2 = arith.constant 0 : index
    %1 = vector.load %arg3[%c0_1, %c0_2] : memref<128x512xbf16, #tpu.memory_space<vmem>>, vector<128x512xbf16>
    %cst = arith.constant dense<0.000000e+00> : vector<256x512xf32>
    %2 = tpu.matmul %0, %1, %cst {dimension_numbers = #tpu.dot_dimension_numbers<[1], [0], [0], [1], [0, 0, 1, 1], [], []>} : vector<256x128xbf16>, vector<128x512xbf16>, vector<256x512xf32> -> vector<256x512xf32>
    %c0_3 = arith.constant 0 : index
    %c0_4 = arith.constant 0 : index
    %3 = vector.load %arg4[%c0_3, %c0_4] : memref<1x512xf32, #tpu.memory_space<vmem>>, vector<1x512xf32>
    %4 = vector.broadcast %3 : vector<1x512xf32> to vector<256x512xf32>
    %5 = arith.addf %2, %4 : vector<256x512xf32>
    %6 = arith.truncf %5 : vector<256x512xf32> to vector<256x512xbf16>
    %c0_5 = arith.constant 0 : index
    %c0_6 = arith.constant 0 : index
    %7 = vector.load %arg5[%c0_5, %c0_6] : memref<256x512xbf16, #tpu.memory_space<vmem>>, vector<256x512xbf16>
    tpu.vector_store %arg5[%c0_5, %c0_6], %6 {strides = array<i32>} : memref<256x512xbf16, #tpu.memory_space<vmem>>, vector<256x512xbf16>,
    return
  }
  func.func @transform_0(%arg0: i32, %arg1: i32) -> (i32, i32) {
    %c0_i32 = arith.constant 0 : i32
    %c0_i32_0 = arith.constant 0 : i32
    return %arg1, %c0_i32 : i32, i32
  }
  func.func @transform_1(%arg0: i32, %arg1: i32) -> (i32, i32) {
    %c0_i32 = arith.constant 0 : i32
    %c0_i32_0 = arith.constant 0 : i32
    return %c0_i32, %arg0 : i32, i32
  }
  func.func @transform_2(%arg0: i32, %arg1: i32) -> (i32, i32) {
    %c0_i32 = arith.constant 0 : i32
    %c0_i32_0 = arith.constant 0 : i32
    return %c0_i32, %arg0 : i32, i32
  }
  func.func @transform_3(%arg0: i32, %arg1: i32) -> (i32, i32) {
    %c0_i32 = arith.constant 0 : i32
    return %arg1, %arg0 : i32, i32
  }
}

</mosaic_0001>

<llo_original>
// kernel: tpu_custom_call.1
$region0: #{tpu_custom_call.1}
  #allocation0 [shape = 'u32[]', space=smem, size = 0x4, offset = 0x4, fixed_abs, tag = 'smem constant byte address 0x4 - core index']
  #allocation1 [shape = 'u32[72,128]{1,0:T(1,128)}', space=vmem, size = 0x9000, scoped, tag = 'internal scratch']
  %s0 = inlined_call_operand.hbm [shape: bf16[256,128], index: 0, kind: input, shape index: {}]
  %s1 = inlined_call_operand.hbm [shape: bf16[128,512], index: 1, kind: input, shape index: {}]
  %s2 = inlined_call_operand.hbm [shape: f32[1,512], index: 2, kind: input, shape index: {}]
  %s3 = inlined_call_operand.hbm [shape: bf16[256,512], index: 3, kind: output, shape index: {}]
  %s4 = sld [smem:[#allocation0]]
  $region34: #{tpu_custom_call.1} parent=0
    _
  %s6 = ssub.s32 1, %s4
  %s7 = scalar_select 0, %s6, %s4
  $region1: #{tpu_custom_call.1} parent=0
    #allocation2 [shape = 'u8[65536]{0}', space=vmem, size = 0x10000, scoped, tag = 'input window, operand 0, single buffered']
    #allocation3 [shape = 's32[1]{0}', space=sflag, size = 0x4, scoped, tag = 'scoped memory for tpu_custom_call.1']
    #allocation4 [shape = 's32[1]{0}', space=sflag, size = 0x4, scoped, tag = 'scoped memory for tpu_custom_call.1']
    #allocation5 [shape = 'u8[131072]{0}', space=vmem, size = 0x20000, scoped, tag = 'input window, operand 1, single buffered']
    #allocation6 [shape = 's32[1]{0}', space=sflag, size = 0x4, scoped, tag = 'scoped memory for tpu_custom_call.1']
    #allocation7 [shape = 'u8[2048]{0}', space=vmem, size = 0x800, scoped, tag = 'input window, operand 2, single buffered']
    #allocation8 [shape = 'u8[262144]{0}', space=vmem, size = 0x40000, scoped, tag = 'output window, operand 0, single buffered']
    %8 = vsyncpa [#allocation3], 0
    %9 = vsyncpa [#allocation6], 0
    %10 = vsyncpa [#allocation4], 0
    // Predicated region
    $region2: #{tpu_custom_call.1} parent=1 // pred_check
      _
    $region3: #{tpu_custom_call.1} parent=1 // pred_check_branch
      %12 = sbr.rel (0) target = $region5
    $region4: #{tpu_custom_call.1} parent=1 // pred_region
      %14 = vsyncadd [#allocation3], 0
      %s15 = sshll.u32 %s0, 4
      %s16 = int_to_ptr.hbm [resolvable:$true] %s15
      %s17 = sshll.u32 [#allocation2], 4
      %s18 = int_to_ptr.vmem [resolvable:$true] %s17
      %23 = dma.hbm_to_vmem [thread:$0]  %s16, 2048, %s18, [#allocation3], 64, 64, 4
    $region5: #{tpu_custom_call.1} parent=1 // pred_fallthru
      _
    // Predicated region
    $region6: #{tpu_custom_call.1} parent=1 // pred_check
      _
    $region7: #{tpu_custom_call.1} parent=1 // pred_check_branch
      %25 = sbr.rel (0) target = $region9
    $region8: #{tpu_custom_call.1} parent=1 // pred_region
      %27 = vsyncadd [#allocation6], 0
      %s28 = sshll.u32 %s1, 4
      %s29 = int_to_ptr.hbm [resolvable:$true] %s28
      %s30 = sshll.u32 [#allocation5], 4
      %s31 = int_to_ptr.vmem [resolvable:$true] %s30
      %36 = dma.hbm_to_vmem [thread:$0]  %s29, 4096, %s31, [#allocation6], 256, 256, 16
    $region9: #{tpu_custom_call.1} parent=1 // pred_fallthru
      _
    // Predicated region
    $region10: #{tpu_custom_call.1} parent=1 // pred_check
      _
    $region11: #{tpu_custom_call.1} parent=1 // pred_check_branch
      %38 = sbr.rel (0) target = $region13
    $region12: #{tpu_custom_call.1} parent=1 // pred_region
      %40 = vsyncadd [#allocation6], 0
      %s42 = sshll.u32 %s2, 4
      %s43 = int_to_ptr.hbm [resolvable:$true] %s42
      %s44 = sshll.u32 [#allocation7], 4
      %s45 = int_to_ptr.vmem [resolvable:$true] %s44
      %47 = dma.hbm_to_vmem [thread:$0]  %s43, 64, %s45, [#allocation6]
    $region13: #{tpu_custom_call.1} parent=1 // pred_fallthru
      _
    // Predicated region
    $region14: #{tpu_custom_call.1} parent=1 // pred_check
      _
    $region15: #{tpu_custom_call.1} parent=1 // pred_check_branch
      %49 = sbr.rel (0) target = $region17
    $region16: #{tpu_custom_call.1} parent=1 // pred_region
      %51 = dma.done [#allocation3], 2048
    $region17: #{tpu_custom_call.1} parent=1 // pred_fallthru
      _
    // Predicated region
    $region18: #{tpu_custom_call.1} parent=1 // pred_check
      _
    $region19: #{tpu_custom_call.1} parent=1 // pred_check_branch
      %53 = sbr.rel (0) target = $region21
    $region20: #{tpu_custom_call.1} parent=1 // pred_region
      %55 = dma.done [#allocation6], 4096
    $region21: #{tpu_custom_call.1} parent=1 // pred_fallthru
      _
    // Predicated region
    $region22: #{tpu_custom_call.1} parent=1 // pred_check
      _
    $region23: #{tpu_custom_call.1} parent=1 // pred_check_branch
      %57 = sbr.rel (0) target = $region25
    $region24: #{tpu_custom_call.1} parent=1 // pred_region
      %59 = dma.done [#allocation6], 64
    $region25: #{tpu_custom_call.1} parent=1 // pred_fallthru
      _
    %v60 = vld [vmem:[#allocation2] sm:$0xf]
    %v61 = vld [vmem:[#allocation2 + $0x4] sm:$0xf]
    %v62 = vld [vmem:[#allocation2 + $0x8] sm:$0xf]
    %v63 = vld [vmem:[#allocation2 + $0xc] sm:$0xf]
    %v64 = vld [vmem:[#allocation2 + $0x10] sm:$0xf]
    %v65 = vld [vmem:[#allocation2 + $0x14] sm:$0xf]
    %v66 = vld [vmem:[#allocation2 + $0x18] sm:$0xf]
    %v67 = vld [vmem:[#allocation2 + $0x1c] sm:$0xf]
    %v68 = vld [vmem:[#allocation2 + $0x20] sm:$0xf]
    %v69 = vld [vmem:[#allocation2 + $0x24] sm:$0xf]
    %v70 = vld [vmem:[#allocation2 + $0x28] sm:$0xf]
    %v71 = vld [vmem:[#allocation2 + $0x2c] sm:$0xf]
    %v72 = vld [vmem:[#allocation2 + $0x30] sm:$0xf]
    %v73 = vld [vmem:[#allocation2 + $0x34] sm:$0xf]
    %v74 = vld [vmem:[#allocation2 + $0x38] sm:$0xf]
    %v75 = vld [vmem:[#allocation2 + $0x3c] sm:$0xf]
    %v76 = vld [vmem:[#allocation2 + $0x40] sm:$0xf]
    %v77 = vld [vmem:[#allocation2 + $0x44] sm:$0xf]
    %v78 = vld [vmem:[#allocation2 + $0x48] sm:$0xf]
    %v79 = vld [vmem:[#allocation2 + $0x4c] sm:$0xf]
    %v80 = vld [vmem:[#allocation2 + $0x50] sm:$0xf]
    %v81 = vld [vmem:[#allocation2 + $0x54] sm:$0xf]
    %v82 = vld [vmem:[#allocation2 + $0x58] sm:$0xf]
    %v83 = vld [vmem:[#allocation2 + $0x5c] sm:$0xf]
    %v84 = vld [vmem:[#allocation2 + $0x60] sm:$0xf]
    %v85 = vld [vmem:[#allocation2 + $0x64] sm:$0xf]
    %v86 = vld [vmem:[#allocation2 + $0x68] sm:$0xf]
    %v87 = vld [vmem:[#allocation2 + $0x6c] sm:$0xf]
    %v88 = vld [vmem:[#allocation2 + $0x70] sm:$0xf]
    %v89 = vld [vmem:[#allocation2 + $0x74] sm:$0xf]
    %v90 = vld [vmem:[#allocation2 + $0x78] sm:$0xf]
    %v91 = vld [vmem:[#allocation2 + $0x7c] sm:$0xf]
    %v92 = vld [vmem:[#allocation5] sm:$0xff]
    %v93 = vld [vmem:[#allocation5 + $0x8] sm:$0xff]
    %v94 = vld [vmem:[#allocation5 + $0x10] sm:$0xff]
    %v95 = vld [vmem:[#allocation5 + $0x18] sm:$0xff]
    %v96 = vld [vmem:[#allocation5 + $0x20] sm:$0xff]
    %v97 = vld [vmem:[#allocation5 + $0x28] sm:$0xff]
    %v98 = vld [vmem:[#allocation5 + $0x30] sm:$0xff]
    %v99 = vld [vmem:[#allocation5 + $0x38] sm:$0xff]
    %v100 = vld [vmem:[#allocation5 + $0x40] sm:$0xff]
    %v101 = vld [vmem:[#allocation5 + $0x48] sm:$0xff]
    %v102 = vld [vmem:[#allocation5 + $0x50] sm:$0xff]
    %v103 = vld [vmem:[#allocation5 + $0x58] sm:$0xff]
    %v104 = vld [vmem:[#allocation5 + $0x60] sm:$0xff]
    %v105 = vld [vmem:[#allocation5 + $0x68] sm:$0xff]
    %v106 = vld [vmem:[#allocation5 + $0x70] sm:$0xff]
    %v107 = vld [vmem:[#allocation5 + $0x78] sm:$0xff]
    %v108 = vld [vmem:[#allocation5 + $0x80] sm:$0xff]
    %v109 = vld [vmem:[#allocation5 + $0x88] sm:$0xff]
    %v110 = vld [vmem:[#allocation5 + $0x90] sm:$0xff]
    %v111 = vld [vmem:[#allocation5 + $0x98] sm:$0xff]
    %v112 = vld [vmem:[#allocation5 + $0xa0] sm:$0xff]
    %v113 = vld [vmem:[#allocation5 + $0xa8] sm:$0xff]
    %v114 = vld [vmem:[#allocation5 + $0xb0] sm:$0xff]
    %v115 = vld [vmem:[#allocation5 + $0xb8] sm:$0xff]
    %v116 = vld [vmem:[#allocation5 + $0xc0] sm:$0xff]
    %v117 = vld [vmem:[#allocation5 + $0xc8] sm:$0xff]
    %v118 = vld [vmem:[#allocation5 + $0xd0] sm:$0xff]
    %v119 = vld [vmem:[#allocation5 + $0xd8] sm:$0xff]
    %v120 = vld [vmem:[#allocation5 + $0xe0] sm:$0xff]
    %v121 = vld [vmem:[#allocation5 + $0xe8] sm:$0xff]
    %v122 = vld [vmem:[#allocation5 + $0xf0] sm:$0xff]
    %v123 = vld [vmem:[#allocation5 + $0xf8] sm:$0xff]
    %v124 = vld [vmem:[#allocation7] sm:$0xf]
    %v126 = vperm.slane %v124, 0
    %v127 = vperm.slane %v124, 1
    %v128 = vperm.slane %v124, 2
    %v129 = vperm.slane %v124, 3
    %v166 = vunpack.c.l.b16 %v60
    %v167 = vunpack.c.l.b16 %v61
    %v168 = vunpack.c.l.b16 %v62
    %v169 = vunpack.c.l.b16 %v63
    %v170 = vunpack.c.l.b16 %v64
    %v171 = vunpack.c.l.b16 %v65
    %v172 = vunpack.c.l.b16 %v66
    %v173 = vunpack.c.l.b16 %v67
    %v174 = vunpack.c.l.b16 %v68
    %v175 = vunpack.c.l.b16 %v69
    %v176 = vunpack.c.l.b16 %v70
    %v177 = vunpack.c.l.b16 %v71
    %v178 = vunpack.c.l.b16 %v72
    %v179 = vunpack.c.l.b16 %v73
    %v180 = vunpack.c.l.b16 %v74
    %v181 = vunpack.c.l.b16 %v75
    %v182 = vunpack.c.l.b16 %v76
    %v183 = vunpack.c.l.b16 %v77
    %v184 = vunpack.c.l.b16 %v78
    %v185 = vunpack.c.l.b16 %v79
    %v186 = vunpack.c.l.b16 %v80
    %v187 = vunpack.c.l.b16 %v81
    %v188 = vunpack.c.l.b16 %v82
    %v189 = vunpack.c.l.b16 %v83
    %v190 = vunpack.c.l.b16 %v84
    %v191 = vunpack.c.l.b16 %v85
    %v192 = vunpack.c.l.b16 %v86
    %v193 = vunpack.c.l.b16 %v87
    %v194 = vunpack.c.l.b16 %v88
    %v195 = vunpack.c.l.b16 %v89
    %v196 = vunpack.c.l.b16 %v90
    %v197 = vunpack.c.l.b16 %v91
    %v198 = vpack.c.b16 %v167, %v166
    %v199 = vpack.c.b16 %v169, %v168
    %v200 = vpack.c.b16 %v171, %v170
    %v201 = vpack.c.b16 %v173, %v172
    %v202 = vpack.c.b16 %v175, %v174
    %v203 = vpack.c.b16 %v177, %v176
    %v204 = vpack.c.b16 %v179, %v178
    %v205 = vpack.c.b16 %v181, %v180
    %v206 = vpack.c.b16 %v183, %v182
    %v207 = vpack.c.b16 %v185, %v184
    %v208 = vpack.c.b16 %v187, %v186
    %v209 = vpack.c.b16 %v189, %v188
    %v210 = vpack.c.b16 %v191, %v190
    %v211 = vpack.c.b16 %v193, %v192
    %v212 = vpack.c.b16 %v195, %v194
    %v213 = vpack.c.b16 %v197, %v196
    %v262 = vunpack.c.l.b16 %v92
    %v263 = vunpack.c.h.b16 %v92
    %v264 = vunpack.c.l.b16 %v93
    %v265 = vunpack.c.h.b16 %v93
    %v266 = vunpack.c.l.b16 %v94
    %v267 = vunpack.c.h.b16 %v94
    %v268 = vunpack.c.l.b16 %v95
    %v269 = vunpack.c.h.b16 %v95
    %v270 = vunpack.c.l.b16 %v96
    %v271 = vunpack.c.h.b16 %v96
    %v272 = vunpack.c.l.b16 %v97
    %v273 = vunpack.c.h.b16 %v97
    %v274 = vunpack.c.l.b16 %v98
    %v275 = vunpack.c.h.b16 %v98
    %v276 = vunpack.c.l.b16 %v99
    %v277 = vunpack.c.h.b16 %v99
    %v278 = vunpack.c.l.b16 %v100
    %v279 = vunpack.c.h.b16 %v100
    %v280 = vunpack.c.l.b16 %v101
    %v281 = vunpack.c.h.b16 %v101
    %v282 = vunpack.c.l.b16 %v102
    %v283 = vunpack.c.h.b16 %v102
    %v284 = vunpack.c.l.b16 %v103
    %v285 = vunpack.c.h.b16 %v103
    %v286 = vunpack.c.l.b16 %v104
    %v287 = vunpack.c.h.b16 %v104
    %v288 = vunpack.c.l.b16 %v105
    %v289 = vunpack.c.h.b16 %v105
    %v290 = vunpack.c.l.b16 %v106
    %v291 = vunpack.c.h.b16 %v106
    %v292 = vunpack.c.l.b16 %v107
    %v293 = vunpack.c.h.b16 %v107
    %v294 = vunpack.c.l.b16 %v108
    %v295 = vunpack.c.h.b16 %v108
    %v296 = vunpack.c.l.b16 %v109
    %v297 = vunpack.c.h.b16 %v109
    %v298 = vunpack.c.l.b16 %v110
    %v299 = vunpack.c.h.b16 %v110
    %v300 = vunpack.c.l.b16 %v111
    %v301 = vunpack.c.h.b16 %v111
    %v302 = vunpack.c.l.b16 %v112
    %v303 = vunpack.c.h.b16 %v112
    %v304 = vunpack.c.l.b16 %v113
    %v305 = vunpack.c.h.b16 %v113
    %v306 = vunpack.c.l.b16 %v114
    %v307 = vunpack.c.h.b16 %v114
    %v308 = vunpack.c.l.b16 %v115
    %v309 = vunpack.c.h.b16 %v115
    %v310 = vunpack.c.l.b16 %v116
    %v311 = vunpack.c.h.b16 %v116
    %v312 = vunpack.c.l.b16 %v117
    %v313 = vunpack.c.h.b16 %v117
    %v314 = vunpack.c.l.b16 %v118
    %v315 = vunpack.c.h.b16 %v118
    %v316 = vunpack.c.l.b16 %v119
    %v317 = vunpack.c.h.b16 %v119
    %v318 = vunpack.c.l.b16 %v120
    %v319 = vunpack.c.h.b16 %v120
    %v320 = vunpack.c.l.b16 %v121
    %v321 = vunpack.c.h.b16 %v121
    %v322 = vunpack.c.l.b16 %v122
    %v323 = vunpack.c.h.b16 %v122
    %v324 = vunpack.c.l.b16 %v123
    %v325 = vunpack.c.h.b16 %v123
    %v326 = vpack.c.b16 %v266, %v262
    %v327 = vpack.c.b16 %v267, %v263
    %v328 = vpack.c.b16 %v268, %v264
    %v329 = vpack.c.b16 %v269, %v265
    %v330 = vpack.c.b16 %v274, %v270
    %v331 = vpack.c.b16 %v275, %v271
    %v332 = vpack.c.b16 %v276, %v272
    %v333 = vpack.c.b16 %v277, %v273
    %v334 = vpack.c.b16 %v282, %v278
    %v335 = vpack.c.b16 %v283, %v279
    %v336 = vpack.c.b16 %v284, %v280
    %v337 = vpack.c.b16 %v285, %v281
    %v338 = vpack.c.b16 %v290, %v286
    %v339 = vpack.c.b16 %v291, %v287
    %v340 = vpack.c.b16 %v292, %v288
    %v341 = vpack.c.b16 %v293, %v289
    %v342 = vpack.c.b16 %v298, %v294
    %v343 = vpack.c.b16 %v299, %v295
    %v344 = vpack.c.b16 %v300, %v296
    %v345 = vpack.c.b16 %v301, %v297
    %v346 = vpack.c.b16 %v306, %v302
    %v347 = vpack.c.b16 %v307, %v303
    %v348 = vpack.c.b16 %v308, %v304
    %v349 = vpack.c.b16 %v309, %v305
    %v350 = vpack.c.b16 %v314, %v310
    %v351 = vpack.c.b16 %v315, %v311
    %v352 = vpack.c.b16 %v316, %v312
    %v353 = vpack.c.b16 %v317, %v313
    %v354 = vpack.c.b16 %v322, %v318
    %v355 = vpack.c.b16 %v323, %v319
    %v356 = vpack.c.b16 %v324, %v320
    %v357 = vpack.c.b16 %v325, %v321
    %390 = vmatpush.bf16.msra.mxu0 %v354
    %391 = vmatpush.bf16.msra.mxu0 %v350
    %392 = vmatpush.bf16.msra.mxu0 %v346
    %393 = vmatpush.bf16.msra.mxu0 %v342
    %394 = vmatpush.bf16.msra.mxu0 %v338
    %395 = vmatpush.bf16.msra.mxu0 %v334
    %396 = vmatpush.bf16.msra.mxu0 %v330
    %397 = vmatpush.bf16.msra.mxu0 %v326
    %398 = vmatmul.bf16.gmra.mxu0 %v198
    %v399 = vpop.f32.mrf.mxu0
    %v400 = vadd.f32 %v126, %v399
    %v401 = vpop.f32.mrf.mxu0
    %v402 = vadd.f32 %v126, %v401
    %403 = vmatmul.bf16.gmra.mxu0 %v199
    %v404 = vpop.f32.mrf.mxu0
    %v405 = vadd.f32 %v126, %v404
    %v406 = vpop.f32.mrf.mxu0
    %v407 = vadd.f32 %v126, %v406
    %408 = vmatmul.bf16.gmra.mxu0 %v200
    %v409 = vpop.f32.mrf.mxu0
    %v410 = vadd.f32 %v126, %v409
    %v411 = vpop.f32.mrf.mxu0
    %v412 = vadd.f32 %v126, %v411
    %413 = vmatmul.bf16.gmra.mxu0 %v201
    %v414 = vpop.f32.mrf.mxu0
    %v415 = vadd.f32 %v126, %v414
    %v416 = vpop.f32.mrf.mxu0
    %v417 = vadd.f32 %v126, %v416
    %418 = vmatmul.bf16.gmra.mxu0 %v202
    %v419 = vpop.f32.mrf.mxu0
    %v420 = vadd.f32 %v126, %v419
    %v421 = vpop.f32.mrf.mxu0
    %v422 = vadd.f32 %v126, %v421
    %423 = vmatmul.bf16.gmra.mxu0 %v203
    %v424 = vpop.f32.mrf.mxu0
    %v425 = vadd.f32 %v126, %v424
    %v426 = vpop.f32.mrf.mxu0
    %v427 = vadd.f32 %v126, %v426
    %428 = vmatmul.bf16.gmra.mxu0 %v204
    %v429 = vpop.f32.mrf.mxu0
    %v430 = vadd.f32 %v126, %v429
    %v431 = vpop.f32.mrf.mxu0
    %v432 = vadd.f32 %v126, %v431
    %433 = vmatmul.bf16.gmra.mxu0 %v205
    %v434 = vpop.f32.mrf.mxu0
    %v435 = vadd.f32 %v126, %v434
    %v436 = vpop.f32.mrf.mxu0
    %v437 = vadd.f32 %v126, %v436
    %438 = vmatmul.bf16.gmra.mxu0 %v206
    %v439 = vpop.f32.mrf.mxu0
    %v440 = vadd.f32 %v126, %v439
    %v441 = vpop.f32.mrf.mxu0
    %v442 = vadd.f32 %v126, %v441
    %443 = vmatmul.bf16.gmra.mxu0 %v207
    %v444 = vpop.f32.mrf.mxu0
    %v445 = vadd.f32 %v126, %v444
    %v446 = vpop.f32.mrf.mxu0
    %v447 = vadd.f32 %v126, %v446
    %448 = vmatmul.bf16.gmra.mxu0 %v208
    %v449 = vpop.f32.mrf.mxu0
    %v450 = vadd.f32 %v126, %v449
    %v451 = vpop.f32.mrf.mxu0
    %v452 = vadd.f32 %v126, %v451
    %453 = vmatmul.bf16.gmra.mxu0 %v209
    %v454 = vpop.f32.mrf.mxu0
    %v455 = vadd.f32 %v126, %v454
    %v456 = vpop.f32.mrf.mxu0
    %v457 = vadd.f32 %v126, %v456
    %458 = vmatmul.bf16.gmra.mxu0 %v210
    %v459 = vpop.f32.mrf.mxu0
    %v460 = vadd.f32 %v126, %v459
    %v461 = vpop.f32.mrf.mxu0
    %v462 = vadd.f32 %v126, %v461
    %463 = vmatmul.bf16.gmra.mxu0 %v211
    %v464 = vpop.f32.mrf.mxu0
    %v465 = vadd.f32 %v126, %v464
    %v466 = vpop.f32.mrf.mxu0
    %v467 = vadd.f32 %v126, %v466
    %468 = vmatmul.bf16.gmra.mxu0 %v212
    %v469 = vpop.f32.mrf.mxu0
    %v470 = vadd.f32 %v126, %v469
    %v471 = vpop.f32.mrf.mxu0
    %v472 = vadd.f32 %v126, %v471
    %473 = vmatmul.bf16.gmra.mxu0 %v213
    %v474 = vpop.f32.mrf.mxu0
    %v475 = vadd.f32 %v126, %v474
    %v476 = vpop.f32.mrf.mxu0
    %v477 = vadd.f32 %v126, %v476
    %478 = vdwg.mxu0
    %479 = vmatpush.bf16.msra.mxu0 %v355
    %480 = vmatpush.bf16.msra.mxu0 %v351
    %481 = vmatpush.bf16.msra.mxu0 %v347
    %482 = vmatpush.bf16.msra.mxu0 %v343
    %483 = vmatpush.bf16.msra.mxu0 %v339
    %484 = vmatpush.bf16.msra.mxu0 %v335
    %485 = vmatpush.bf16.msra.mxu0 %v331
    %486 = vmatpush.bf16.msra.mxu0 %v327
    %487 = vmatmul.bf16.gmra.mxu0 %v198
    %v488 = vpop.f32.mrf.mxu0
    %v489 = vadd.f32 %v127, %v488
    %v490 = vpop.f32.mrf.mxu0
    %v491 = vadd.f32 %v127, %v490
    %492 = vmatmul.bf16.gmra.mxu0 %v199
    %v493 = vpop.f32.mrf.mxu0
    %v494 = vadd.f32 %v127, %v493
    %v495 = vpop.f32.mrf.mxu0
    %v496 = vadd.f32 %v127, %v495
    %497 = vmatmul.bf16.gmra.mxu0 %v200
    %v498 = vpop.f32.mrf.mxu0
    %v499 = vadd.f32 %v127, %v498
    %v500 = vpop.f32.mrf.mxu0
    %v501 = vadd.f32 %v127, %v500
    %502 = vmatmul.bf16.gmra.mxu0 %v201
    %v503 = vpop.f32.mrf.mxu0
    %v504 = vadd.f32 %v127, %v503
    %v505 = vpop.f32.mrf.mxu0
    %v506 = vadd.f32 %v127, %v505
    %507 = vmatmul.bf16.gmra.mxu0 %v202
    %v508 = vpop.f32.mrf.mxu0
    %v509 = vadd.f32 %v127, %v508
    %v510 = vpop.f32.mrf.mxu0
    %v511 = vadd.f32 %v127, %v510
    %512 = vmatmul.bf16.gmra.mxu0 %v203
    %v513 = vpop.f32.mrf.mxu0
    %v514 = vadd.f32 %v127, %v513
    %v515 = vpop.f32.mrf.mxu0
    %v516 = vadd.f32 %v127, %v515
    %517 = vmatmul.bf16.gmra.mxu0 %v204
    %v518 = vpop.f32.mrf.mxu0
    %v519 = vadd.f32 %v127, %v518
    %v520 = vpop.f32.mrf.mxu0
    %v521 = vadd.f32 %v127, %v520
    %522 = vmatmul.bf16.gmra.mxu0 %v205
    %v523 = vpop.f32.mrf.mxu0
    %v524 = vadd.f32 %v127, %v523
    %v525 = vpop.f32.mrf.mxu0
    %v526 = vadd.f32 %v127, %v525
    %527 = vmatmul.bf16.gmra.mxu0 %v206
    %v528 = vpop.f32.mrf.mxu0
    %v529 = vadd.f32 %v127, %v528
    %v530 = vpop.f32.mrf.mxu0
    %v531 = vadd.f32 %v127, %v530
    %532 = vmatmul.bf16.gmra.mxu0 %v207
    %v533 = vpop.f32.mrf.mxu0
    %v534 = vadd.f32 %v127, %v533
    %v535 = vpop.f32.mrf.mxu0
    %v536 = vadd.f32 %v127, %v535
    %537 = vmatmul.bf16.gmra.mxu0 %v208
    %v538 = vpop.f32.mrf.mxu0
    %v539 = vadd.f32 %v127, %v538
    %v540 = vpop.f32.mrf.mxu0
    %v541 = vadd.f32 %v127, %v540
    %542 = vmatmul.bf16.gmra.mxu0 %v209
    %v543 = vpop.f32.mrf.mxu0
    %v544 = vadd.f32 %v127, %v543
    %v545 = vpop.f32.mrf.mxu0
    %v546 = vadd.f32 %v127, %v545
    %547 = vmatmul.bf16.gmra.mxu0 %v210
    %v548 = vpop.f32.mrf.mxu0
    %v549 = vadd.f32 %v127, %v548
    %v550 = vpop.f32.mrf.mxu0
    %v551 = vadd.f32 %v127, %v550
    %552 = vmatmul.bf16.gmra.mxu0 %v211
    %v553 = vpop.f32.mrf.mxu0
    %v554 = vadd.f32 %v127, %v553
    %v555 = vpop.f32.mrf.mxu0
    %v556 = vadd.f32 %v127, %v555
    %557 = vmatmul.bf16.gmra.mxu0 %v212
    %v558 = vpop.f32.mrf.mxu0
    %v559 = vadd.f32 %v127, %v558
    %v560 = vpop.f32.mrf.mxu0
    %v561 = vadd.f32 %v127, %v560
    %562 = vmatmul.bf16.gmra.mxu0 %v213
    %v563 = vpop.f32.mrf.mxu0
    %v564 = vadd.f32 %v127, %v563
    %v565 = vpop.f32.mrf.mxu0
    %v566 = vadd.f32 %v127, %v565
    %567 = vdwg.mxu0
    %568 = vmatpush.bf16.msra.mxu0 %v356
    %569 = vmatpush.bf16.msra.mxu0 %v352
    %570 = vmatpush.bf16.msra.mxu0 %v348
    %571 = vmatpush.bf16.msra.mxu0 %v344
    %572 = vmatpush.bf16.msra.mxu0 %v340
    %573 = vmatpush.bf16.msra.mxu0 %v336
    %574 = vmatpush.bf16.msra.mxu0 %v332
    %575 = vmatpush.bf16.msra.mxu0 %v328
    %576 = vmatmul.bf16.gmra.mxu0 %v198
    %v577 = vpop.f32.mrf.mxu0
    %v578 = vadd.f32 %v128, %v577
    %v579 = vpop.f32.mrf.mxu0
    %v580 = vadd.f32 %v128, %v579
    %581 = vmatmul.bf16.gmra.mxu0 %v199
    %v582 = vpop.f32.mrf.mxu0
    %v583 = vadd.f32 %v128, %v582
    %v584 = vpop.f32.mrf.mxu0
    %v585 = vadd.f32 %v128, %v584
    %586 = vmatmul.bf16.gmra.mxu0 %v200
    %v587 = vpop.f32.mrf.mxu0
    %v588 = vadd.f32 %v128, %v587
    %v589 = vpop.f32.mrf.mxu0
    %v590 = vadd.f32 %v128, %v589
    %591 = vmatmul.bf16.gmra.mxu0 %v201
    %v592 = vpop.f32.mrf.mxu0
    %v593 = vadd.f32 %v128, %v592
    %v594 = vpop.f32.mrf.mxu0
    %v595 = vadd.f32 %v128, %v594
    %596 = vmatmul.bf16.gmra.mxu0 %v202
    %v597 = vpop.f32.mrf.mxu0
    %v598 = vadd.f32 %v128, %v597
    %v599 = vpop.f32.mrf.mxu0
    %v600 = vadd.f32 %v128, %v599
    %601 = vmatmul.bf16.gmra.mxu0 %v203
    %v602 = vpop.f32.mrf.mxu0
    %v603 = vadd.f32 %v128, %v602
    %v604 = vpop.f32.mrf.mxu0
    %v605 = vadd.f32 %v128, %v604
    %606 = vmatmul.bf16.gmra.mxu0 %v204
    %v607 = vpop.f32.mrf.mxu0
    %v608 = vadd.f32 %v128, %v607
    %v609 = vpop.f32.mrf.mxu0
    %v610 = vadd.f32 %v128, %v609
    %611 = vmatmul.bf16.gmra.mxu0 %v205
    %v612 = vpop.f32.mrf.mxu0
    %v613 = vadd.f32 %v128, %v612
    %v614 = vpop.f32.mrf.mxu0
    %v615 = vadd.f32 %v128, %v614
    %616 = vmatmul.bf16.gmra.mxu0 %v206
    %v617 = vpop.f32.mrf.mxu0
    %v618 = vadd.f32 %v128, %v617
    %v619 = vpop.f32.mrf.mxu0
    %v620 = vadd.f32 %v128, %v619
    %621 = vmatmul.bf16.gmra.mxu0 %v207
    %v622 = vpop.f32.mrf.mxu0
    %v623 = vadd.f32 %v128, %v622
    %v624 = vpop.f32.mrf.mxu0
    %v625 = vadd.f32 %v128, %v624
    %626 = vmatmul.bf16.gmra.mxu0 %v208
    %v627 = vpop.f32.mrf.mxu0
    %v628 = vadd.f32 %v128, %v627
    %v629 = vpop.f32.mrf.mxu0
    %v630 = vadd.f32 %v128, %v629
    %631 = vmatmul.bf16.gmra.mxu0 %v209
    %v632 = vpop.f32.mrf.mxu0
    %v633 = vadd.f32 %v128, %v632
    %v634 = vpop.f32.mrf.mxu0
    %v635 = vadd.f32 %v128, %v634
    %636 = vmatmul.bf16.gmra.mxu0 %v210
    %v637 = vpop.f32.mrf.mxu0
    %v638 = vadd.f32 %v128, %v637
    %v639 = vpop.f32.mrf.mxu0
    %v640 = vadd.f32 %v128, %v639
    %641 = vmatmul.bf16.gmra.mxu0 %v211
    %v642 = vpop.f32.mrf.mxu0
    %v643 = vadd.f32 %v128, %v642
    %v644 = vpop.f32.mrf.mxu0
    %v645 = vadd.f32 %v128, %v644
    %646 = vmatmul.bf16.gmra.mxu0 %v212
    %v647 = vpop.f32.mrf.mxu0
    %v648 = vadd.f32 %v128, %v647
    %v649 = vpop.f32.mrf.mxu0
    %v650 = vadd.f32 %v128, %v649
    %651 = vmatmul.bf16.gmra.mxu0 %v213
    %v652 = vpop.f32.mrf.mxu0
    %v653 = vadd.f32 %v128, %v652
    %v654 = vpop.f32.mrf.mxu0
    %v655 = vadd.f32 %v128, %v654
    %656 = vdwg.mxu0
    %657 = vmatpush.bf16.msra.mxu0 %v357
    %658 = vmatpush.bf16.msra.mxu0 %v353
    %659 = vmatpush.bf16.msra.mxu0 %v349
    %660 = vmatpush.bf16.msra.mxu0 %v345
    %661 = vmatpush.bf16.msra.mxu0 %v341
    %662 = vmatpush.bf16.msra.mxu0 %v337
    %663 = vmatpush.bf16.msra.mxu0 %v333
    %664 = vmatpush.bf16.msra.mxu0 %v329
    %665 = vmatmul.bf16.gmra.mxu0 %v198
    %v666 = vpop.f32.mrf.mxu0
    %v667 = vadd.f32 %v129, %v666
    %v668 = vpop.f32.mrf.mxu0
    %v669 = vadd.f32 %v129, %v668
    %670 = vmatmul.bf16.gmra.mxu0 %v199
    %v671 = vpop.f32.mrf.mxu0
    %v672 = vadd.f32 %v129, %v671
    %v673 = vpop.f32.mrf.mxu0
    %v674 = vadd.f32 %v129, %v673
    %675 = vmatmul.bf16.gmra.mxu0 %v200
    %v676 = vpop.f32.mrf.mxu0
    %v677 = vadd.f32 %v129, %v676
    %v678 = vpop.f32.mrf.mxu0
    %v679 = vadd.f32 %v129, %v678
    %680 = vmatmul.bf16.gmra.mxu0 %v201
    %v681 = vpop.f32.mrf.mxu0
    %v682 = vadd.f32 %v129, %v681
    %v683 = vpop.f32.mrf.mxu0
    %v684 = vadd.f32 %v129, %v683
    %685 = vmatmul.bf16.gmra.mxu0 %v202
    %v686 = vpop.f32.mrf.mxu0
    %v687 = vadd.f32 %v129, %v686
    %v688 = vpop.f32.mrf.mxu0
    %v689 = vadd.f32 %v129, %v688
    %690 = vmatmul.bf16.gmra.mxu0 %v203
    %v691 = vpop.f32.mrf.mxu0
    %v692 = vadd.f32 %v129, %v691
    %v693 = vpop.f32.mrf.mxu0
    %v694 = vadd.f32 %v129, %v693
    %695 = vmatmul.bf16.gmra.mxu0 %v204
    %v696 = vpop.f32.mrf.mxu0
    %v697 = vadd.f32 %v129, %v696
    %v698 = vpop.f32.mrf.mxu0
    %v699 = vadd.f32 %v129, %v698
    %700 = vmatmul.bf16.gmra.mxu0 %v205
    %v701 = vpop.f32.mrf.mxu0
    %v702 = vadd.f32 %v129, %v701
    %v703 = vpop.f32.mrf.mxu0
    %v704 = vadd.f32 %v129, %v703
    %705 = vmatmul.bf16.gmra.mxu0 %v206
    %v706 = vpop.f32.mrf.mxu0
    %v707 = vadd.f32 %v129, %v706
    %v708 = vpop.f32.mrf.mxu0
    %v709 = vadd.f32 %v129, %v708
    %710 = vmatmul.bf16.gmra.mxu0 %v207
    %v711 = vpop.f32.mrf.mxu0
    %v712 = vadd.f32 %v129, %v711
    %v713 = vpop.f32.mrf.mxu0
    %v714 = vadd.f32 %v129, %v713
    %715 = vmatmul.bf16.gmra.mxu0 %v208
    %v716 = vpop.f32.mrf.mxu0
    %v717 = vadd.f32 %v129, %v716
    %v718 = vpop.f32.mrf.mxu0
    %v719 = vadd.f32 %v129, %v718
    %720 = vmatmul.bf16.gmra.mxu0 %v209
    %v721 = vpop.f32.mrf.mxu0
    %v722 = vadd.f32 %v129, %v721
    %v723 = vpop.f32.mrf.mxu0
    %v724 = vadd.f32 %v129, %v723
    %725 = vmatmul.bf16.gmra.mxu0 %v210
    %v726 = vpop.f32.mrf.mxu0
    %v727 = vadd.f32 %v129, %v726
    %v728 = vpop.f32.mrf.mxu0
    %v729 = vadd.f32 %v129, %v728
    %730 = vmatmul.bf16.gmra.mxu0 %v211
    %v731 = vpop.f32.mrf.mxu0
    %v732 = vadd.f32 %v129, %v731
    %v733 = vpop.f32.mrf.mxu0
    %v734 = vadd.f32 %v129, %v733
    %735 = vmatmul.bf16.gmra.mxu0 %v212
    %v736 = vpop.f32.mrf.mxu0
    %v737 = vadd.f32 %v129, %v736
    %v738 = vpop.f32.mrf.mxu0
    %v739 = vadd.f32 %v129, %v738
    %740 = vmatmul.bf16.gmra.mxu0 %v213
    %v741 = vpop.f32.mrf.mxu0
    %v742 = vadd.f32 %v129, %v741
    %v743 = vpop.f32.mrf.mxu0
    %v744 = vadd.f32 %v129, %v743
    %745 = vdwg.mxu0
    %v746 = vpack.c.bf16 %v489, %v400
    %v747 = vpack.c.bf16 %v667, %v578
    %v748 = vpack.c.bf16 %v491, %v402
    %v749 = vpack.c.bf16 %v669, %v580
    %v750 = vpack.c.bf16 %v494, %v405
    %v751 = vpack.c.bf16 %v672, %v583
    %v752 = vpack.c.bf16 %v496, %v407
    %v753 = vpack.c.bf16 %v674, %v585
    %v754 = vpack.c.bf16 %v499, %v410
    %v755 = vpack.c.bf16 %v677, %v588
    %v756 = vpack.c.bf16 %v501, %v412
    %v757 = vpack.c.bf16 %v679, %v590
    %v758 = vpack.c.bf16 %v504, %v415
    %v759 = vpack.c.bf16 %v682, %v593
    %v760 = vpack.c.bf16 %v506, %v417
    %v761 = vpack.c.bf16 %v684, %v595
    %v762 = vpack.c.bf16 %v509, %v420
    %v763 = vpack.c.bf16 %v687, %v598
    %v764 = vpack.c.bf16 %v511, %v422
    %v765 = vpack.c.bf16 %v689, %v600
    %v766 = vpack.c.bf16 %v514, %v425
    %v767 = vpack.c.bf16 %v692, %v603
    %v768 = vpack.c.bf16 %v516, %v427
    %v769 = vpack.c.bf16 %v694, %v605
    %v770 = vpack.c.bf16 %v519, %v430
    %v771 = vpack.c.bf16 %v697, %v608
    %v772 = vpack.c.bf16 %v521, %v432
    %v773 = vpack.c.bf16 %v699, %v610
    %v774 = vpack.c.bf16 %v524, %v435
    %v775 = vpack.c.bf16 %v702, %v613
    %v776 = vpack.c.bf16 %v526, %v437
    %v777 = vpack.c.bf16 %v704, %v615
    %v778 = vpack.c.bf16 %v529, %v440
    %v779 = vpack.c.bf16 %v707, %v618
    %v780 = vpack.c.bf16 %v531, %v442
    %v781 = vpack.c.bf16 %v709, %v620
    %v782 = vpack.c.bf16 %v534, %v445
    %v783 = vpack.c.bf16 %v712, %v623
    %v784 = vpack.c.bf16 %v536, %v447
    %v785 = vpack.c.bf16 %v714, %v625
    %v786 = vpack.c.bf16 %v539, %v450
    %v787 = vpack.c.bf16 %v717, %v628
    %v788 = vpack.c.bf16 %v541, %v452
    %v789 = vpack.c.bf16 %v719, %v630
    %v790 = vpack.c.bf16 %v544, %v455
    %v791 = vpack.c.bf16 %v722, %v633
    %v792 = vpack.c.bf16 %v546, %v457
    %v793 = vpack.c.bf16 %v724, %v635
    %v794 = vpack.c.bf16 %v549, %v460
    %v795 = vpack.c.bf16 %v727, %v638
    %v796 = vpack.c.bf16 %v551, %v462
    %v797 = vpack.c.bf16 %v729, %v640
    %v798 = vpack.c.bf16 %v554, %v465
    %v799 = vpack.c.bf16 %v732, %v643
    %v800 = vpack.c.bf16 %v556, %v467
    %v801 = vpack.c.bf16 %v734, %v645
    %v802 = vpack.c.bf16 %v559, %v470
    %v803 = vpack.c.bf16 %v737, %v648
    %v804 = vpack.c.bf16 %v561, %v472
    %v805 = vpack.c.bf16 %v739, %v650
    %v806 = vpack.c.bf16 %v564, %v475
    %v807 = vpack.c.bf16 %v742, %v653
    %v808 = vpack.c.bf16 %v566, %v477
    %v809 = vpack.c.bf16 %v744, %v655
    %810 = vst [vmem:[#allocation8] sm:$0xff] %v746
    %811 = vst [vmem:[#allocation8 + $0x8] sm:$0xff] %v747
    %812 = vst [vmem:[#allocation8 + $0x10] sm:$0xff] %v748
    %813 = vst [vmem:[#allocation8 + $0x18] sm:$0xff] %v749
    %814 = vst [vmem:[#allocation8 + $0x20] sm:$0xff] %v750
    %815 = vst [vmem:[#allocation8 + $0x28] sm:$0xff] %v751
    %816 = vst [vmem:[#allocation8 + $0x30] sm:$0xff] %v752
    %817 = vst [vmem:[#allocation8 + $0x38] sm:$0xff] %v753
    %818 = vst [vmem:[#allocation8 + $0x40] sm:$0xff] %v754
    %819 = vst [vmem:[#allocation8 + $0x48] sm:$0xff] %v755
    %820 = vst [vmem:[#allocation8 + $0x50] sm:$0xff] %v756
    %821 = vst [vmem:[#allocation8 + $0x58] sm:$0xff] %v757
    %822 = vst [vmem:[#allocation8 + $0x60] sm:$0xff] %v758
    %823 = vst [vmem:[#allocation8 + $0x68] sm:$0xff] %v759
    %824 = vst [vmem:[#allocation8 + $0x70] sm:$0xff] %v760
    %825 = vst [vmem:[#allocation8 + $0x78] sm:$0xff] %v761
    %826 = vst [vmem:[#allocation8 + $0x80] sm:$0xff] %v762
    %827 = vst [vmem:[#allocation8 + $0x88] sm:$0xff] %v763
    %828 = vst [vmem:[#allocation8 + $0x90] sm:$0xff] %v764
    %829 = vst [vmem:[#allocation8 + $0x98] sm:$0xff] %v765
    %830 = vst [vmem:[#allocation8 + $0xa0] sm:$0xff] %v766
    %831 = vst [vmem:[#allocation8 + $0xa8] sm:$0xff] %v767
    %832 = vst [vmem:[#allocation8 + $0xb0] sm:$0xff] %v768
    %833 = vst [vmem:[#allocation8 + $0xb8] sm:$0xff] %v769
    %834 = vst [vmem:[#allocation8 + $0xc0] sm:$0xff] %v770
    %835 = vst [vmem:[#allocation8 + $0xc8] sm:$0xff] %v771
    %836 = vst [vmem:[#allocation8 + $0xd0] sm:$0xff] %v772
    %837 = vst [vmem:[#allocation8 + $0xd8] sm:$0xff] %v773
    %838 = vst [vmem:[#allocation8 + $0xe0] sm:$0xff] %v774
    %839 = vst [vmem:[#allocation8 + $0xe8] sm:$0xff] %v775
    %840 = vst [vmem:[#allocation8 + $0xf0] sm:$0xff] %v776
    %841 = vst [vmem:[#allocation8 + $0xf8] sm:$0xff] %v777
    %842 = vst [vmem:[#allocation8 + $0x100] sm:$0xff] %v778
    %843 = vst [vmem:[#allocation8 + $0x108] sm:$0xff] %v779
    %844 = vst [vmem:[#allocation8 + $0x110] sm:$0xff] %v780
    %845 = vst [vmem:[#allocation8 + $0x118] sm:$0xff] %v781
    %846 = vst [vmem:[#allocation8 + $0x120] sm:$0xff] %v782
    %847 = vst [vmem:[#allocation8 + $0x128] sm:$0xff] %v783
    %848 = vst [vmem:[#allocation8 + $0x130] sm:$0xff] %v784
    %849 = vst [vmem:[#allocation8 + $0x138] sm:$0xff] %v785
    %850 = vst [vmem:[#allocation8 + $0x140] sm:$0xff] %v786
    %851 = vst [vmem:[#allocation8 + $0x148] sm:$0xff] %v787
    %852 = vst [vmem:[#allocation8 + $0x150] sm:$0xff] %v788
    %853 = vst [vmem:[#allocation8 + $0x158] sm:$0xff] %v789
    %854 = vst [vmem:[#allocation8 + $0x160] sm:$0xff] %v790
    %855 = vst [vmem:[#allocation8 + $0x168] sm:$0xff] %v791
    %856 = vst [vmem:[#allocation8 + $0x170] sm:$0xff] %v792
    %857 = vst [vmem:[#allocation8 + $0x178] sm:$0xff] %v793
    %858 = vst [vmem:[#allocation8 + $0x180] sm:$0xff] %v794
    %859 = vst [vmem:[#allocation8 + $0x188] sm:$0xff] %v795
    %860 = vst [vmem:[#allocation8 + $0x190] sm:$0xff] %v796
    %861 = vst [vmem:[#allocation8 + $0x198] sm:$0xff] %v797
    %862 = vst [vmem:[#allocation8 + $0x1a0] sm:$0xff] %v798
    %863 = vst [vmem:[#allocation8 + $0x1a8] sm:$0xff] %v799
    %864 = vst [vmem:[#allocation8 + $0x1b0] sm:$0xff] %v800
    %865 = vst [vmem:[#allocation8 + $0x1b8] sm:$0xff] %v801
    %866 = vst [vmem:[#allocation8 + $0x1c0] sm:$0xff] %v802
    %867 = vst [vmem:[#allocation8 + $0x1c8] sm:$0xff] %v803
    %868 = vst [vmem:[#allocation8 + $0x1d0] sm:$0xff] %v804
    %869 = vst [vmem:[#allocation8 + $0x1d8] sm:$0xff] %v805
    %870 = vst [vmem:[#allocation8 + $0x1e0] sm:$0xff] %v806
    %871 = vst [vmem:[#allocation8 + $0x1e8] sm:$0xff] %v807
    %872 = vst [vmem:[#allocation8 + $0x1f0] sm:$0xff] %v808
    %873 = vst [vmem:[#allocation8 + $0x1f8] sm:$0xff] %v809
    // Predicated region
    $region26: #{tpu_custom_call.1} parent=1 // pred_check
      _
    $region27: #{tpu_custom_call.1} parent=1 // pred_check_branch
      %875 = sbr.rel (0) target = $region29
    $region28: #{tpu_custom_call.1} parent=1 // pred_region
      %877 = vsyncadd [#allocation4], 0
      %s878 = sshll.u32 [#allocation8], 4
      %s879 = int_to_ptr.vmem [resolvable:$true] %s878
      %s880 = sshll.u32 %s3, 4
      %s881 = int_to_ptr.hbm [resolvable:$true] %s880
      %886 = dma.vmem_to_hbm [thread:$0]  %s879, 8192, %s881, [#allocation4], 256, 256, 16
    $region29: #{tpu_custom_call.1} parent=1 // pred_fallthru
      _
    // Predicated region
    $region30: #{tpu_custom_call.1} parent=1 // pred_check
      _
    $region31: #{tpu_custom_call.1} parent=1 // pred_check_branch
      %888 = sbr.rel (0) target = $region33
    $region32: #{tpu_custom_call.1} parent=1 // pred_region
      %890 = dma.done [#allocation4], 8192
    $region33: #{tpu_custom_call.1} parent=1 // pred_fallthru
      _
    %891 = vsyncpa [#allocation3], 1
    %892 = vsyncpa [#allocation6], 1
    %893 = vsyncpa [#allocation4], 1

</llo_original>
